<compile_context>
chip_gen: v5e
topology: v5e:2x2
jax: 0.10.0
libtpu: 0.0.40
codegen_flags: <defaults>
</compile_context>

<pallas_src>
import jax
import jax.numpy as jnp
from jax.experimental import pallas as pl
from jax.experimental.pallas import tpu as pltpu

# Constants from CM.__init__
K_SIZE = (1, 3, 3, 3, 5, 5, 5)
DILA   = (1, 1, 2, 3, 1, 2, 3)
PADS   = (0, 1, 2, 3, 2, 4, 6)
NCONV  = len(K_SIZE)                      # 7 "kernel_nums"

# Per-conv region offsets: out[r] = sum_t x[r + t*dila - pads] (zero outside [0, N)).
CONV_SHIFTS = tuple(
    tuple(t * d - p for t in range(k)) for k, d, p in zip(K_SIZE, DILA, PADS)
)
UNIQUE_SHIFTS = tuple(sorted({s for shifts in CONV_SHIFTS for s in shifts}))  # 11 shifts


def _cm_kernel(x_ref, w_ref, out_ref, cat_ref):
    # x_ref:   [b_tile, num_r, D]   tile of batch items
    # w_ref:   [D, 1]               nn.Linear(embed, 1).weight^T (bias cancels)
    # out_ref: [b_tile, num_r, D]   att_x for this tile
    # cat_ref: [b_tile, 7*num_r, D] scratch holding torch.cat(xx, dim=1) per item
    b_tile, num_r, D = x_ref.shape
    M = b_tile * num_r

    # One (batch, region) row per sublane; merge of leading dims is layout-trivial
    # because the wrapper guarantees num_r % 8 == 0 or b_tile == 1.
    x = x_ref[...].astype(jnp.float32).reshape(M, D)
    w = w_ref[...].astype(jnp.float32)                              # [D, 1]

    # Region index of every flattened row (rows are batch-major, region-minor).
    region = jax.lax.rem(jax.lax.broadcasted_iota(jnp.int32, (M, 1), 0), num_r)

    # --- shared shifted copies of the input along the region (sublane) axis ------
    # shifted[s][f] = x[f + s] when row f+s belongs to the same batch item, else 0.
    # pltpu.roll (np.roll semantics) keeps this an XLU rotate + one VPU select.
    def shift_rows(s):
        if s == 0:
            return x
        if abs(s) >= num_r:
            return jnp.zeros_like(x)
        rolled = pltpu.roll(x, (-s) % M, axis=0)        # rolled[f] = x[(f + s) % M]
        keep = (region < num_r - s) if s > 0 else (region >= -s)
        return jnp.where(keep, rolled, 0.0)

    shifted = {s: shift_rows(s) for s in UNIQUE_SHIFTS}

    # --- 7 dilated ones-filter convs (moving sums) + ReLU -> dense cat stores ----
    # cat_ref[b, q*num_r + r, :] == torch.cat(xx, dim=1)[b, q*num_r + r, :].
    # TODO(synk): on v6e/v7x the conv sums and the cat scratch can run in bf16
    # (pass cat_dtype=jnp.bfloat16); kept in f32 here for exact parity everywhere.
    for q in range(NCONV):
        conv_acc = shifted[CONV_SHIFTS[q][0]]
        for s in CONV_SHIFTS[q][1:]:
            conv_acc = conv_acc + shifted[s]
        conv_q = jnp.maximum(conv_acc, 0.0)                          # ReLU, [M, D]
        cat_ref[:, q * num_r:(q + 1) * num_r, :] = (
            conv_q.reshape(b_tile, num_r, D).astype(cat_ref.dtype))

    # --- attention: ONE pass over cat, online softmax over the 7 variants --------
    # torch's .view(bs, num_r, 7, -1) makes variant j of group i the cat row 7i+j,
    # so variant j across all groups is a single sublane-strided read (stride 7).
    # TODO(synk): if vld ever binds, replace these 7 strided reads with one dense
    # cat read + per-row weights + 6 pltpu.roll sublane adds (review alternative).
    m = None
    z = None
    att = None
    for j in range(NCONV):
        yj = cat_ref[:, pl.ds(j, num_r, stride=NCONV), :]
        yj = yj.astype(jnp.float32).reshape(M, D)
        # Logit on the MXU (idle otherwise); frees the XLU for the rolls above.
        sj = jnp.dot(yj, w, preferred_element_type=jnp.float32)      # [M, 1]
        if j == 0:
            m, z, att = sj, jnp.ones_like(sj), yj
        else:
            m_new = jnp.maximum(m, sj)
            a = jnp.exp(m - m_new)                                   # EUP
            e = jnp.exp(sj - m_new)
            att = a * att + e * yj
            z = a * z + e
            m = m_new
    # z >= 1 always; EUP reciprocal stays off the VALU path.
    out = att * pl.reciprocal(z, approx=True)
    out_ref[...] = out.reshape(b_tile, num_r, D).astype(out_ref.dtype)


def _vmem_budget_and_limit():
    """Per-generation VMEM sizing.

    ~1/3 of capacity for the working set and ~1/2 as the scoped-VMEM limit:
    v7x (64 MiB physical) -> ~21 MiB budget / 32 MiB limit;
    v5e/v6e (128 MiB)     ->  40 MiB budget / 64 MiB limit.
    """
    try:
        cap = int(pltpu.get_tpu_info().vmem_capacity_bytes)
    except Exception:
        cap = 0
    if cap <= 0:
        cap = 64 * 1024 * 1024          # v7x-safe fallback
    budget = min(cap // 3, 40 * 1024 * 1024)
    limit = min(max(cap // 2, 32 * 1024 * 1024), 64 * 1024 * 1024)
    return budget, limit


def _choose_b_tile(bs, num_r, embed, in_itemsize, budget_bytes):
    """How many batch items each grid step processes.

    Targets 512-1024 flattened rows per step (measured HBM-roofline sweet spot),
    bounded by a VMEM budget covering the f32 cat scratch (7x), ~13 live f32
    temporaries of the conv stage (x + 11 shifted copies + accumulator) and the
    double-buffered in/out blocks, while keeping >= 2 grid steps (pipelining) and
    preferring an even step count (v7x has two TensorCores under 'parallel').
    """
    if num_r % 8 != 0:
        # TODO(synk): pad the region axis to a multiple of 8 instead; for now keep
        # the [M, D] <-> [b_tile, num_r, D] reshapes layout-trivial.
        return 1
    bytes_per_row = embed * (7 * 4 + 13 * 4 + 2 * 2 * in_itemsize)
    max_rows = max(num_r, budget_bytes // max(bytes_per_row, 1))
    max_rows = min(max_rows, 1024)
    bt = max(1, min(bs, max_rows // num_r))
    if bs >= 2:
        bt = min(bt, bs // 2)                       # keep >= 2 grid steps
    while bt > 1 and bs % bt != 0:
        bt -= 1
    if bt > 1 and (bs // bt) % 2 == 1:              # prefer an even step count
        for cand in range(bt, 0, -1):
            if bs % cand == 0 and (bs // cand) % 2 == 0:
                bt = cand
                break
    return bt


def cm_forward(v_emb, fc_weight, fc_bias=None, *, b_tile=None, cat_dtype=jnp.float32):
    """Pallas TPU implementation of CM.forward.

    v_emb: [bs, num_r, embed] (f32 or bf16; f32 math inside the kernel).
    fc_weight: [1, embed].  fc_bias is accepted for signature parity but unused:
    a bias on the 1-unit Linear shifts all 7 softmax logits equally and cancels
    exactly.  cat_dtype=jnp.bfloat16 halves the cat scratch on v6e/v7x.
    """
    del fc_bias
    bs, num_r, embed = v_emb.shape
    orig_embed = embed

    w = jnp.reshape(fc_weight, (1, embed))
    # Lane-dense padding: zero feature lanes are exact for this op (zero conv rows,
    # zero logit contribution, zero output lanes) and make every store a full vst.
    lane_pad = (-embed) % 128
    if lane_pad:
        v_emb = jnp.pad(v_emb, ((0, 0), (0, 0), (0, lane_pad)))
        w = jnp.pad(w, ((0, 0), (0, lane_pad)))
        embed = embed + lane_pad
    w_col = jnp.transpose(w).astype(jnp.float32)          # [embed, 1] for the MXU dot

    budget, vmem_limit = _vmem_budget_and_limit()
    if b_tile is None:
        b_tile = _choose_b_tile(bs, num_r, embed,
                                jnp.dtype(v_emb.dtype).itemsize, budget)
    assert bs % b_tile == 0, (bs, b_tile)

    out = pl.pallas_call(
        _cm_kernel,
        out_shape=jax.ShapeDtypeStruct((bs, num_r, embed), v_emb.dtype),
        grid_spec=pltpu.PrefetchScalarGridSpec(
            num_scalar_prefetch=0,
            grid=(bs // b_tile,),
            in_specs=[
                pl.BlockSpec((b_tile, num_r, embed), lambda i: (i, 0, 0)),  # v_emb
                pl.BlockSpec((embed, 1), lambda i: (0, 0)),                 # weight
            ],
            out_specs=pl.BlockSpec((b_tile, num_r, embed), lambda i: (i, 0, 0)),
            scratch_shapes=[
                pltpu.VMEM((b_tile, NCONV * num_r, embed), cat_dtype),      # cat
            ],
        ),
        compiler_params=pltpu.CompilerParams(
            dimension_semantics=("parallel",),
            vmem_limit_bytes=vmem_limit,
        ),
    )(v_emb, w_col)

    if lane_pad:
        out = out[..., :orig_embed]
    return out


def cm_reference(v_emb, fc_weight, fc_bias):
    """Pure-JAX reference mirroring the PyTorch forward exactly (bias included)."""
    bs, N, D = v_emb.shape
    convs = []
    for q in range(NCONV):
        xp = jnp.pad(v_emb, ((0, 0), (PADS[q], PADS[q]), (0, 0)))
        acc = jnp.zeros_like(v_emb)
        for t in range(K_SIZE[q]):
            acc = acc + xp[:, t * DILA[q]: t * DILA[q] + N, :]
        convs.append(jax.nn.relu(acc))
    cat = jnp.concatenate(convs, axis=1)            # [bs, 7*N, D]  (torch.cat dim=1)
    xx = cat.reshape(bs, N, NCONV, D)               # .view(bs, num_r, 7, -1)
    scores = jnp.einsum("bijd,d->bij", xx, fc_weight[0]) + fc_bias[0]
    p = jax.nn.softmax(scores, axis=-1)[..., None]
    return jnp.sum(p * xx, axis=2)


if __name__ == "__main__":
    bs, num_r, embed = 4, 8, 128
    key = jax.random.PRNGKey(0)
    k1, k2, k3 = jax.random.split(key, 3)
    v_emb = jax.random.normal(k1, (bs, num_r, embed), dtype=jnp.float32)
    # nn.Linear(embed_size, 1): weight [1, embed], bias [1] -- deterministic init.
    fc_weight = jax.random.normal(k2, (1, embed), dtype=jnp.float32) / jnp.sqrt(embed)
    fc_bias = jax.random.normal(k3, (1,), dtype=jnp.float32) * 0.01

    out = jax.jit(cm_forward)(v_emb, fc_weight, fc_bias)
    out = jax.block_until_ready(out)

    ref = cm_reference(v_emb, fc_weight, fc_bias)
    assert out.shape == (bs, num_r, embed)
    # Tolerance covers the approximate EUP reciprocal of the softmax denominator and
    # any reduced-precision MXU accumulation of the 7 attention logits; structural /
    # indexing / shift-direction bugs produce O(1) errors and are still caught.
    if not jnp.allclose(out, ref, rtol=1e-2, atol=1e-2):
        err = float(jnp.max(jnp.abs(out - ref)))
        raise SystemExit(f"Pallas output does not match reference (max abs err {err})")
    print("KERNEL_OK")
</pallas_src>

<mosaic_0001>
module attributes {stable_mosaic.version = 11 : i64} {
  func.func @_cm_kernel(%arg0: i32, %arg1: memref<2x8x128xf32, #tpu.memory_space<vmem>>, %arg2: memref<128x1xf32, #tpu.memory_space<vmem>>, %arg3: memref<2x8x128xf32, #tpu.memory_space<vmem>>, %arg4: memref<2x56x128xf32, #tpu.memory_space<vmem>>) attributes {dimension_semantics = [#tpu.dimension_semantics<parallel>], iteration_bounds = array<i64: 2>, scalar_prefetch = 0 : i64, scratch_operands = 1 : i64, tpu.core_type = #tpu.core_type<tc>, window_params = [{transform_indices = @transform_0, window_bounds = array<i64: 2, 8, 128>}, {pipeline_mode = #tpu.pipeline_mode<synchronous>, transform_indices = @transform_1, window_bounds = array<i64: 128, 1>}, {transform_indices = @transform_2, window_bounds = array<i64: 2, 8, 128>}]} {
    %c0 = arith.constant 0 : index
    %c0_0 = arith.constant 0 : index
    %c0_1 = arith.constant 0 : index
    %0 = vector.load %arg1[%c0, %c0_0, %c0_1] : memref<2x8x128xf32, #tpu.memory_space<vmem>>, vector<2x8x128xf32>
    %1 = vector.shape_cast %0 : vector<2x8x128xf32> to vector<16x128xf32>
    %c0_2 = arith.constant 0 : index
    %c0_3 = arith.constant 0 : index
    %2 = vector.load %arg2[%c0_2, %c0_3] : memref<128x1xf32, #tpu.memory_space<vmem>>, vector<128x1xf32>
    %3 = tpu.iota {dimensions = array<i32: 0>} : vector<16x1xi32>
    %c8_i32 = arith.constant 8 : i32
    %4 = vector.broadcast %c8_i32 : i32 to vector<16x1xi32>
    %5 = arith.remsi %3, %4 : vector<16x1xi32>
    %c6_i32 = arith.constant 6 : i32
    %6 = tpu.dynamic_rotate %1 by %c6_i32 dim 0 : vector<16x128xf32>, i32 -> vector<16x128xf32>
    %c6_i32_4 = arith.constant 6 : i32
    %7 = vector.broadcast %c6_i32_4 : i32 to vector<16x1xi32>
    %8 = arith.cmpi sge, %5, %7 : vector<16x1xi32>
    %cst = arith.constant 0.000000e+00 : f32
    %9 = vector.shape_cast %8 : vector<16x1xi1> to vector<16x1xi1>
    %10 = vector.broadcast %9 : vector<16x1xi1> to vector<16x128xi1>
    %11 = vector.broadcast %cst : f32 to vector<16x128xf32>
    %12 = arith.select %10, %6, %11 : vector<16x128xi1>, vector<16x128xf32>
    %c4_i32 = arith.constant 4 : i32
    %13 = tpu.dynamic_rotate %1 by %c4_i32 dim 0 : vector<16x128xf32>, i32 -> vector<16x128xf32>
    %c4_i32_5 = arith.constant 4 : i32
    %14 = vector.broadcast %c4_i32_5 : i32 to vector<16x1xi32>
    %15 = arith.cmpi sge, %5, %14 : vector<16x1xi32>
    %cst_6 = arith.constant 0.000000e+00 : f32
    %16 = vector.shape_cast %15 : vector<16x1xi1> to vector<16x1xi1>
    %17 = vector.broadcast %16 : vector<16x1xi1> to vector<16x128xi1>
    %18 = vector.broadcast %cst_6 : f32 to vector<16x128xf32>
    %19 = arith.select %17, %13, %18 : vector<16x128xi1>, vector<16x128xf32>
    %c3_i32 = arith.constant 3 : i32
    %20 = tpu.dynamic_rotate %1 by %c3_i32 dim 0 : vector<16x128xf32>, i32 -> vector<16x128xf32>
    %c3_i32_7 = arith.constant 3 : i32
    %21 = vector.broadcast %c3_i32_7 : i32 to vector<16x1xi32>
    %22 = arith.cmpi sge, %5, %21 : vector<16x1xi32>
    %cst_8 = arith.constant 0.000000e+00 : f32
    %23 = vector.shape_cast %22 : vector<16x1xi1> to vector<16x1xi1>
    %24 = vector.broadcast %23 : vector<16x1xi1> to vector<16x128xi1>
    %25 = vector.broadcast %cst_8 : f32 to vector<16x128xf32>
    %26 = arith.select %24, %20, %25 : vector<16x128xi1>, vector<16x128xf32>
    %c2_i32 = arith.constant 2 : i32
    %27 = tpu.dynamic_rotate %1 by %c2_i32 dim 0 : vector<16x128xf32>, i32 -> vector<16x128xf32>
    %c2_i32_9 = arith.constant 2 : i32
    %28 = vector.broadcast %c2_i32_9 : i32 to vector<16x1xi32>
    %29 = arith.cmpi sge, %5, %28 : vector<16x1xi32>
    %cst_10 = arith.constant 0.000000e+00 : f32
    %30 = vector.shape_cast %29 : vector<16x1xi1> to vector<16x1xi1>
    %31 = vector.broadcast %30 : vector<16x1xi1> to vector<16x128xi1>
    %32 = vector.broadcast %cst_10 : f32 to vector<16x128xf32>
    %33 = arith.select %31, %27, %32 : vector<16x128xi1>, vector<16x128xf32>
    %c1_i32 = arith.constant 1 : i32
    %34 = tpu.dynamic_rotate %1 by %c1_i32 dim 0 : vector<16x128xf32>, i32 -> vector<16x128xf32>
    %c1_i32_11 = arith.constant 1 : i32
    %35 = vector.broadcast %c1_i32_11 : i32 to vector<16x1xi32>
    %36 = arith.cmpi sge, %5, %35 : vector<16x1xi32>
    %cst_12 = arith.constant 0.000000e+00 : f32
    %37 = vector.shape_cast %36 : vector<16x1xi1> to vector<16x1xi1>
    %38 = vector.broadcast %37 : vector<16x1xi1> to vector<16x128xi1>
    %39 = vector.broadcast %cst_12 : f32 to vector<16x128xf32>
    %40 = arith.select %38, %34, %39 : vector<16x128xi1>, vector<16x128xf32>
    %c15_i32 = arith.constant 15 : i32
    %41 = tpu.dynamic_rotate %1 by %c15_i32 dim 0 : vector<16x128xf32>, i32 -> vector<16x128xf32>
    %c7_i32 = arith.constant 7 : i32
    %42 = vector.broadcast %c7_i32 : i32 to vector<16x1xi32>
    %43 = arith.cmpi slt, %5, %42 : vector<16x1xi32>
    %cst_13 = arith.constant 0.000000e+00 : f32
    %44 = vector.shape_cast %43 : vector<16x1xi1> to vector<16x1xi1>
    %45 = vector.broadcast %44 : vector<16x1xi1> to vector<16x128xi1>
    %46 = vector.broadcast %cst_13 : f32 to vector<16x128xf32>
    %47 = arith.select %45, %41, %46 : vector<16x128xi1>, vector<16x128xf32>
    %c14_i32 = arith.constant 14 : i32
    %48 = tpu.dynamic_rotate %1 by %c14_i32 dim 0 : vector<16x128xf32>, i32 -> vector<16x128xf32>
    %c6_i32_14 = arith.constant 6 : i32
    %49 = vector.broadcast %c6_i32_14 : i32 to vector<16x1xi32>
    %50 = arith.cmpi slt, %5, %49 : vector<16x1xi32>
    %cst_15 = arith.constant 0.000000e+00 : f32
    %51 = vector.shape_cast %50 : vector<16x1xi1> to vector<16x1xi1>
    %52 = vector.broadcast %51 : vector<16x1xi1> to vector<16x128xi1>
    %53 = vector.broadcast %cst_15 : f32 to vector<16x128xf32>
    %54 = arith.select %52, %48, %53 : vector<16x128xi1>, vector<16x128xf32>
    %c13_i32 = arith.constant 13 : i32
    %55 = tpu.dynamic_rotate %1 by %c13_i32 dim 0 : vector<16x128xf32>, i32 -> vector<16x128xf32>
    %c5_i32 = arith.constant 5 : i32
    %56 = vector.broadcast %c5_i32 : i32 to vector<16x1xi32>
    %57 = arith.cmpi slt, %5, %56 : vector<16x1xi32>
    %cst_16 = arith.constant 0.000000e+00 : f32
    %58 = vector.shape_cast %57 : vector<16x1xi1> to vector<16x1xi1>
    %59 = vector.broadcast %58 : vector<16x1xi1> to vector<16x128xi1>
    %60 = vector.broadcast %cst_16 : f32 to vector<16x128xf32>
    %61 = arith.select %59, %55, %60 : vector<16x128xi1>, vector<16x128xf32>
    %c12_i32 = arith.constant 12 : i32
    %62 = tpu.dynamic_rotate %1 by %c12_i32 dim 0 : vector<16x128xf32>, i32 -> vector<16x128xf32>
    %c4_i32_17 = arith.constant 4 : i32
    %63 = vector.broadcast %c4_i32_17 : i32 to vector<16x1xi32>
    %64 = arith.cmpi slt, %5, %63 : vector<16x1xi32>
    %cst_18 = arith.constant 0.000000e+00 : f32
    %65 = vector.shape_cast %64 : vector<16x1xi1> to vector<16x1xi1>
    %66 = vector.broadcast %65 : vector<16x1xi1> to vector<16x128xi1>
    %67 = vector.broadcast %cst_18 : f32 to vector<16x128xf32>
    %68 = arith.select %66, %62, %67 : vector<16x128xi1>, vector<16x128xf32>
    %c10_i32 = arith.constant 10 : i32
    %69 = tpu.dynamic_rotate %1 by %c10_i32 dim 0 : vector<16x128xf32>, i32 -> vector<16x128xf32>
    %c2_i32_19 = arith.constant 2 : i32
    %70 = vector.broadcast %c2_i32_19 : i32 to vector<16x1xi32>
    %71 = arith.cmpi slt, %5, %70 : vector<16x1xi32>
    %cst_20 = arith.constant 0.000000e+00 : f32
    %72 = vector.shape_cast %71 : vector<16x1xi1> to vector<16x1xi1>
    %73 = vector.broadcast %72 : vector<16x1xi1> to vector<16x128xi1>
    %74 = vector.broadcast %cst_20 : f32 to vector<16x128xf32>
    %75 = arith.select %73, %69, %74 : vector<16x128xi1>, vector<16x128xf32>
    %cst_21 = arith.constant 0.000000e+00 : f32
    %76 = vector.broadcast %cst_21 : f32 to vector<16x128xf32>
    %77 = arith.maximumf %1, %76 : vector<16x128xf32>
    %78 = vector.shape_cast %77 : vector<16x128xf32> to vector<2x8x128xf32>
    %c0_22 = arith.constant 0 : index
    %c0_23 = arith.constant 0 : index
    %c0_24 = arith.constant 0 : index
    %79 = vector.load %arg4[%c0_22, %c0_23, %c0_24] : memref<2x56x128xf32, #tpu.memory_space<vmem>>, vector<2x8x128xf32>
    tpu.vector_store %arg4[%c0_22, %c0_23, %c0_24], %78 {strides = array<i32>} : memref<2x56x128xf32, #tpu.memory_space<vmem>>, vector<2x8x128xf32>,
    %80 = arith.addf %40, %1 : vector<16x128xf32>
    %81 = arith.addf %80, %47 : vector<16x128xf32>
    %cst_25 = arith.constant 0.000000e+00 : f32
    %82 = vector.broadcast %cst_25 : f32 to vector<16x128xf32>
    %83 = arith.maximumf %81, %82 : vector<16x128xf32>
    %84 = vector.shape_cast %83 : vector<16x128xf32> to vector<2x8x128xf32>
    %c0_26 = arith.constant 0 : index
    %c8 = arith.constant 8 : index
    %c0_27 = arith.constant 0 : index
    %85 = vector.load %arg4[%c0_26, %c8, %c0_27] : memref<2x56x128xf32, #tpu.memory_space<vmem>>, vector<2x8x128xf32>
    tpu.vector_store %arg4[%c0_26, %c8, %c0_27], %84 {strides = array<i32>} : memref<2x56x128xf32, #tpu.memory_space<vmem>>, vector<2x8x128xf32>,
    %86 = arith.addf %33, %1 : vector<16x128xf32>
    %87 = arith.addf %86, %54 : vector<16x128xf32>
    %cst_28 = arith.constant 0.000000e+00 : f32
    %88 = vector.broadcast %cst_28 : f32 to vector<16x128xf32>
    %89 = arith.maximumf %87, %88 : vector<16x128xf32>
    %90 = vector.shape_cast %89 : vector<16x128xf32> to vector<2x8x128xf32>
    %c0_29 = arith.constant 0 : index
    %c16 = arith.constant 16 : index
    %c0_30 = arith.constant 0 : index
    %91 = vector.load %arg4[%c0_29, %c16, %c0_30] : memref<2x56x128xf32, #tpu.memory_space<vmem>>, vector<2x8x128xf32>
    tpu.vector_store %arg4[%c0_29, %c16, %c0_30], %90 {strides = array<i32>} : memref<2x56x128xf32, #tpu.memory_space<vmem>>, vector<2x8x128xf32>,
    %92 = arith.addf %26, %1 : vector<16x128xf32>
    %93 = arith.addf %92, %61 : vector<16x128xf32>
    %cst_31 = arith.constant 0.000000e+00 : f32
    %94 = vector.broadcast %cst_31 : f32 to vector<16x128xf32>
    %95 = arith.maximumf %93, %94 : vector<16x128xf32>
    %96 = vector.shape_cast %95 : vector<16x128xf32> to vector<2x8x128xf32>
    %c0_32 = arith.constant 0 : index
    %c24 = arith.constant 24 : index
    %c0_33 = arith.constant 0 : index
    %97 = vector.load %arg4[%c0_32, %c24, %c0_33] : memref<2x56x128xf32, #tpu.memory_space<vmem>>, vector<2x8x128xf32>
    tpu.vector_store %arg4[%c0_32, %c24, %c0_33], %96 {strides = array<i32>} : memref<2x56x128xf32, #tpu.memory_space<vmem>>, vector<2x8x128xf32>,
    %98 = arith.addf %33, %40 : vector<16x128xf32>
    %99 = arith.addf %98, %1 : vector<16x128xf32>
    %100 = arith.addf %99, %47 : vector<16x128xf32>
    %101 = arith.addf %100, %54 : vector<16x128xf32>
    %cst_34 = arith.constant 0.000000e+00 : f32
    %102 = vector.broadcast %cst_34 : f32 to vector<16x128xf32>
    %103 = arith.maximumf %101, %102 : vector<16x128xf32>
    %104 = vector.shape_cast %103 : vector<16x128xf32> to vector<2x8x128xf32>
    %c0_35 = arith.constant 0 : index
    %c32 = arith.constant 32 : index
    %c0_36 = arith.constant 0 : index
    %105 = vector.load %arg4[%c0_35, %c32, %c0_36] : memref<2x56x128xf32, #tpu.memory_space<vmem>>, vector<2x8x128xf32>
    tpu.vector_store %arg4[%c0_35, %c32, %c0_36], %104 {strides = array<i32>} : memref<2x56x128xf32, #tpu.memory_space<vmem>>, vector<2x8x128xf32>,
    %106 = arith.addf %19, %33 : vector<16x128xf32>
    %107 = arith.addf %106, %1 : vector<16x128xf32>
    %108 = arith.addf %107, %54 : vector<16x128xf32>
    %109 = arith.addf %108, %68 : vector<16x128xf32>
    %cst_37 = arith.constant 0.000000e+00 : f32
    %110 = vector.broadcast %cst_37 : f32 to vector<16x128xf32>
    %111 = arith.maximumf %109, %110 : vector<16x128xf32>
    %112 = vector.shape_cast %111 : vector<16x128xf32> to vector<2x8x128xf32>
    %c0_38 = arith.constant 0 : index
    %c40 = arith.constant 40 : index
    %c0_39 = arith.constant 0 : index
    %113 = vector.load %arg4[%c0_38, %c40, %c0_39] : memref<2x56x128xf32, #tpu.memory_space<vmem>>, vector<2x8x128xf32>
    tpu.vector_store %arg4[%c0_38, %c40, %c0_39], %112 {strides = array<i32>} : memref<2x56x128xf32, #tpu.memory_space<vmem>>, vector<2x8x128xf32>,
    %114 = arith.addf %12, %26 : vector<16x128xf32>
    %115 = arith.addf %114, %1 : vector<16x128xf32>
    %116 = arith.addf %115, %61 : vector<16x128xf32>
    %117 = arith.addf %116, %75 : vector<16x128xf32>
    %cst_40 = arith.constant 0.000000e+00 : f32
    %118 = vector.broadcast %cst_40 : f32 to vector<16x128xf32>
    %119 = arith.maximumf %117, %118 : vector<16x128xf32>
    %120 = vector.shape_cast %119 : vector<16x128xf32> to vector<2x8x128xf32>
    %c0_41 = arith.constant 0 : index
    %c48 = arith.constant 48 : index
    %c0_42 = arith.constant 0 : index
    %121 = vector.load %arg4[%c0_41, %c48, %c0_42] : memref<2x56x128xf32, #tpu.memory_space<vmem>>, vector<2x8x128xf32>
    tpu.vector_store %arg4[%c0_41, %c48, %c0_42], %120 {strides = array<i32>} : memref<2x56x128xf32, #tpu.memory_space<vmem>>, vector<2x8x128xf32>,
    %c0_43 = arith.constant 0 : index
    %c0_44 = arith.constant 0 : index
    %c0_45 = arith.constant 0 : index
    %122 = tpu.strided_load %arg4[%c0_43, %c0_44, %c0_45] {strides = array<i32: 1, 7, 1>} : memref<2x56x128xf32, #tpu.memory_space<vmem>>, vector<2x8x128xf32>
    %123 = vector.shape_cast %122 : vector<2x8x128xf32> to vector<16x128xf32>
    %cst_46 = arith.constant dense<0.000000e+00> : vector<16x1xf32>
    %124 = tpu.matmul %123, %2, %cst_46 {dimension_numbers = #tpu.dot_dimension_numbers<[1], [0], [0], [1], [0, 0, 1, 1], [], []>} : vector<16x128xf32>, vector<128x1xf32>, vector<16x1xf32> -> vector<16x1xf32>
    %cst_47 = arith.constant 1.000000e+00 : f32
    %125 = vector.broadcast %cst_47 : f32 to vector<16x1xf32>
    %c0_48 = arith.constant 0 : index
    %c1 = arith.constant 1 : index
    %c0_49 = arith.constant 0 : index
    %126 = tpu.strided_load %arg4[%c0_48, %c1, %c0_49] {strides = array<i32: 1, 7, 1>} : memref<2x56x128xf32, #tpu.memory_space<vmem>>, vector<2x8x128xf32>
    %127 = vector.shape_cast %126 : vector<2x8x128xf32> to vector<16x128xf32>
    %cst_50 = arith.constant dense<0.000000e+00> : vector<16x1xf32>
    %128 = tpu.matmul %127, %2, %cst_50 {dimension_numbers = #tpu.dot_dimension_numbers<[1], [0], [0], [1], [0, 0, 1, 1], [], []>} : vector<16x128xf32>, vector<128x1xf32>, vector<16x1xf32> -> vector<16x1xf32>
    %129 = arith.maximumf %124, %128 : vector<16x1xf32>
    %130 = arith.subf %124, %129 : vector<16x1xf32>
    %131 = math.exp %130 : vector<16x1xf32>
    %132 = arith.subf %128, %129 : vector<16x1xf32>
    %133 = math.exp %132 : vector<16x1xf32>
    %134 = vector.broadcast %131 : vector<16x1xf32> to vector<16x128xf32>
    %135 = arith.mulf %134, %123 : vector<16x128xf32>
    %136 = vector.broadcast %133 : vector<16x1xf32> to vector<16x128xf32>
    %137 = arith.mulf %136, %127 : vector<16x128xf32>
    %138 = arith.addf %135, %137 : vector<16x128xf32>
    %139 = arith.mulf %131, %125 : vector<16x1xf32>
    %140 = arith.addf %139, %133 : vector<16x1xf32>
    %c0_51 = arith.constant 0 : index
    %c2 = arith.constant 2 : index
    %c0_52 = arith.constant 0 : index
    %141 = tpu.strided_load %arg4[%c0_51, %c2, %c0_52] {strides = array<i32: 1, 7, 1>} : memref<2x56x128xf32, #tpu.memory_space<vmem>>, vector<2x8x128xf32>
    %142 = vector.shape_cast %141 : vector<2x8x128xf32> to vector<16x128xf32>
    %cst_53 = arith.constant dense<0.000000e+00> : vector<16x1xf32>
    %143 = tpu.matmul %142, %2, %cst_53 {dimension_numbers = #tpu.dot_dimension_numbers<[1], [0], [0], [1], [0, 0, 1, 1], [], []>} : vector<16x128xf32>, vector<128x1xf32>, vector<16x1xf32> -> vector<16x1xf32>
    %144 = arith.maximumf %129, %143 : vector<16x1xf32>
    %145 = arith.subf %129, %144 : vector<16x1xf32>
    %146 = math.exp %145 : vector<16x1xf32>
    %147 = arith.subf %143, %144 : vector<16x1xf32>
    %148 = math.exp %147 : vector<16x1xf32>
    %149 = vector.broadcast %146 : vector<16x1xf32> to vector<16x128xf32>
    %150 = arith.mulf %149, %138 : vector<16x128xf32>
    %151 = vector.broadcast %148 : vector<16x1xf32> to vector<16x128xf32>
    %152 = arith.mulf %151, %142 : vector<16x128xf32>
    %153 = arith.addf %150, %152 : vector<16x128xf32>
    %154 = arith.mulf %146, %140 : vector<16x1xf32>
    %155 = arith.addf %154, %148 : vector<16x1xf32>
    %c0_54 = arith.constant 0 : index
    %c3 = arith.constant 3 : index
    %c0_55 = arith.constant 0 : index
    %156 = tpu.strided_load %arg4[%c0_54, %c3, %c0_55] {strides = array<i32: 1, 7, 1>} : memref<2x56x128xf32, #tpu.memory_space<vmem>>, vector<2x8x128xf32>
    %157 = vector.shape_cast %156 : vector<2x8x128xf32> to vector<16x128xf32>
    %cst_56 = arith.constant dense<0.000000e+00> : vector<16x1xf32>
    %158 = tpu.matmul %157, %2, %cst_56 {dimension_numbers = #tpu.dot_dimension_numbers<[1], [0], [0], [1], [0, 0, 1, 1], [], []>} : vector<16x128xf32>, vector<128x1xf32>, vector<16x1xf32> -> vector<16x1xf32>
    %159 = arith.maximumf %144, %158 : vector<16x1xf32>
    %160 = arith.subf %144, %159 : vector<16x1xf32>
    %161 = math.exp %160 : vector<16x1xf32>
    %162 = arith.subf %158, %159 : vector<16x1xf32>
    %163 = math.exp %162 : vector<16x1xf32>
    %164 = vector.broadcast %161 : vector<16x1xf32> to vector<16x128xf32>
    %165 = arith.mulf %164, %153 : vector<16x128xf32>
    %166 = vector.broadcast %163 : vector<16x1xf32> to vector<16x128xf32>
    %167 = arith.mulf %166, %157 : vector<16x128xf32>
    %168 = arith.addf %165, %167 : vector<16x128xf32>
    %169 = arith.mulf %161, %155 : vector<16x1xf32>
    %170 = arith.addf %169, %163 : vector<16x1xf32>
    %c0_57 = arith.constant 0 : index
    %c4 = arith.constant 4 : index
    %c0_58 = arith.constant 0 : index
    %171 = tpu.strided_load %arg4[%c0_57, %c4, %c0_58] {strides = array<i32: 1, 7, 1>} : memref<2x56x128xf32, #tpu.memory_space<vmem>>, vector<2x8x128xf32>
    %172 = vector.shape_cast %171 : vector<2x8x128xf32> to vector<16x128xf32>
    %cst_59 = arith.constant dense<0.000000e+00> : vector<16x1xf32>
    %173 = tpu.matmul %172, %2, %cst_59 {dimension_numbers = #tpu.dot_dimension_numbers<[1], [0], [0], [1], [0, 0, 1, 1], [], []>} : vector<16x128xf32>, vector<128x1xf32>, vector<16x1xf32> -> vector<16x1xf32>
    %174 = arith.maximumf %159, %173 : vector<16x1xf32>
    %175 = arith.subf %159, %174 : vector<16x1xf32>
    %176 = math.exp %175 : vector<16x1xf32>
    %177 = arith.subf %173, %174 : vector<16x1xf32>
    %178 = math.exp %177 : vector<16x1xf32>
    %179 = vector.broadcast %176 : vector<16x1xf32> to vector<16x128xf32>
    %180 = arith.mulf %179, %168 : vector<16x128xf32>
    %181 = vector.broadcast %178 : vector<16x1xf32> to vector<16x128xf32>
    %182 = arith.mulf %181, %172 : vector<16x128xf32>
    %183 = arith.addf %180, %182 : vector<16x128xf32>
    %184 = arith.mulf %176, %170 : vector<16x1xf32>
    %185 = arith.addf %184, %178 : vector<16x1xf32>
    %c0_60 = arith.constant 0 : index
    %c5 = arith.constant 5 : index
    %c0_61 = arith.constant 0 : index
    %186 = tpu.strided_load %arg4[%c0_60, %c5, %c0_61] {strides = array<i32: 1, 7, 1>} : memref<2x56x128xf32, #tpu.memory_space<vmem>>, vector<2x8x128xf32>
    %187 = vector.shape_cast %186 : vector<2x8x128xf32> to vector<16x128xf32>
    %cst_62 = arith.constant dense<0.000000e+00> : vector<16x1xf32>
    %188 = tpu.matmul %187, %2, %cst_62 {dimension_numbers = #tpu.dot_dimension_numbers<[1], [0], [0], [1], [0, 0, 1, 1], [], []>} : vector<16x128xf32>, vector<128x1xf32>, vector<16x1xf32> -> vector<16x1xf32>
    %189 = arith.maximumf %174, %188 : vector<16x1xf32>
    %190 = arith.subf %174, %189 : vector<16x1xf32>
    %191 = math.exp %190 : vector<16x1xf32>
    %192 = arith.subf %188, %189 : vector<16x1xf32>
    %193 = math.exp %192 : vector<16x1xf32>
    %194 = vector.broadcast %191 : vector<16x1xf32> to vector<16x128xf32>
    %195 = arith.mulf %194, %183 : vector<16x128xf32>
    %196 = vector.broadcast %193 : vector<16x1xf32> to vector<16x128xf32>
    %197 = arith.mulf %196, %187 : vector<16x128xf32>
    %198 = arith.addf %195, %197 : vector<16x128xf32>
    %199 = arith.mulf %191, %185 : vector<16x1xf32>
    %200 = arith.addf %199, %193 : vector<16x1xf32>
    %c0_63 = arith.constant 0 : index
    %c6 = arith.constant 6 : index
    %c0_64 = arith.constant 0 : index
    %201 = tpu.strided_load %arg4[%c0_63, %c6, %c0_64] {strides = array<i32: 1, 7, 1>} : memref<2x56x128xf32, #tpu.memory_space<vmem>>, vector<2x8x128xf32>
    %202 = vector.shape_cast %201 : vector<2x8x128xf32> to vector<16x128xf32>
    %cst_65 = arith.constant dense<0.000000e+00> : vector<16x1xf32>
    %203 = tpu.matmul %202, %2, %cst_65 {dimension_numbers = #tpu.dot_dimension_numbers<[1], [0], [0], [1], [0, 0, 1, 1], [], []>} : vector<16x128xf32>, vector<128x1xf32>, vector<16x1xf32> -> vector<16x1xf32>
    %204 = arith.maximumf %189, %203 : vector<16x1xf32>
    %205 = arith.subf %189, %204 : vector<16x1xf32>
    %206 = math.exp %205 : vector<16x1xf32>
    %207 = arith.subf %203, %204 : vector<16x1xf32>
    %208 = math.exp %207 : vector<16x1xf32>
    %209 = vector.broadcast %206 : vector<16x1xf32> to vector<16x128xf32>
    %210 = arith.mulf %209, %198 : vector<16x128xf32>
    %211 = vector.broadcast %208 : vector<16x1xf32> to vector<16x128xf32>
    %212 = arith.mulf %211, %202 : vector<16x128xf32>
    %213 = arith.addf %210, %212 : vector<16x128xf32>
    %214 = arith.mulf %206, %200 : vector<16x1xf32>
    %215 = arith.addf %214, %208 : vector<16x1xf32>
    %216 = tpu.reciprocal %215 {approx = true} : vector<16x1xf32> -> vector<16x1xf32>
    %217 = vector.broadcast %216 : vector<16x1xf32> to vector<16x128xf32>
    %218 = arith.mulf %213, %217 : vector<16x128xf32>
    %219 = vector.shape_cast %218 : vector<16x128xf32> to vector<2x8x128xf32>
    %c0_66 = arith.constant 0 : index
    %c0_67 = arith.constant 0 : index
    %c0_68 = arith.constant 0 : index
    %220 = vector.load %arg3[%c0_66, %c0_67, %c0_68] : memref<2x8x128xf32, #tpu.memory_space<vmem>>, vector<2x8x128xf32>
    tpu.vector_store %arg3[%c0_66, %c0_67, %c0_68], %219 {strides = array<i32>} : memref<2x8x128xf32, #tpu.memory_space<vmem>>, vector<2x8x128xf32>,
    return
  }
  func.func @transform_0(%arg0: i32) -> (i32, i32, i32) {
    %c0_i32 = arith.constant 0 : i32
    %c0_i32_0 = arith.constant 0 : i32
    %c0_i32_1 = arith.constant 0 : i32
    return %arg0, %c0_i32, %c0_i32_0 : i32, i32, i32
  }
  func.func @transform_1(%arg0: i32) -> (i32, i32) {
    %c0_i32 = arith.constant 0 : i32
    %c0_i32_0 = arith.constant 0 : i32
    %c0_i32_1 = arith.constant 0 : i32
    return %c0_i32, %c0_i32_0 : i32, i32
  }
  func.func @transform_2(%arg0: i32) -> (i32, i32, i32) {
    %c0_i32 = arith.constant 0 : i32
    %c0_i32_0 = arith.constant 0 : i32
    %c0_i32_1 = arith.constant 0 : i32
    return %arg0, %c0_i32, %c0_i32_0 : i32, i32, i32
  }
}

</mosaic_0001>

<llo_original>
// kernel: cm_forward.1
$region0: #{cm_forward.1}
  #allocation0 [shape = 'u32[]', space=smem, size = 0x4, offset = 0x4, fixed_abs, tag = 'smem constant byte address 0x4 - core index']
  #allocation1 [shape = 'u32[72,128]{1,0:T(1,128)}', space=vmem, size = 0x9000, scoped, tag = 'internal scratch']
  #allocation2 [shape = 'f32[2,56,128]{2,1,0:T(8,128)}', space=vmem, size = 0xe000, scoped, tag = 'scratch operand']
  %s0 = inlined_call_operand.vmem [shape: f32[4,8,128], index: 0, kind: input, shape index: {}]
  %s1 = inlined_call_operand.vmem [shape: f32[128,1], index: 1, kind: input, shape index: {}]
  %s2 = inlined_call_operand.hbm [shape: f32[4,8,128], index: 2, kind: output, shape index: {}]
  %s3 = sld [smem:[#allocation0]]
  $region41: #{cm_forward.1} parent=0
    _
  %s5 = ssub.s32 1, %s3
  %s6 = scalar_select 0, %s5, %s3
  $region1: #{cm_forward.1} parent=0
    #allocation3 [shape = 'u8[16384]{0}', space=vmem, size = 0x4000, scoped, tag = 'output window, operand 0']
    #allocation4 [shape = 's32[2]{0}', space=sflag, size = 0x8, scoped, tag = 'scoped memory for cm_forward.1']
    %7 = vsyncpa [#allocation4], 0
    %s8 = scalar_lea.sflag [#allocation4], 1
    %9 = vsyncpa %s8, 0
    loop: start=0, step=1, limit=4
    $region2: #{cm_forward.1} parent=1 // loop_pre_header
      _
    $region3: #{cm_forward.1} parent=1 // loop_header
      %s11 = sphi 0, %s15
      %p12 = scmp.ge.s32.totalorder %s11, 4
      %s21 = sphi 0, %s23
      %s24 = sphi 0, %s21
      %s25 = sphi 0, %s24
      %s41 = sphi 0, %s25
      %s45 = sphi 0, %s45
      %s47 = sphi 0, %s45
      %s48 = sphi 0, %s47
      %s62 = sphi 0, %s48
      %s68 = sphi 0, %s70
      %s71 = sphi 0, %s68
      %s72 = sphi 0, %s71
      %s88 = sphi 0, %s72
    $region4: #{cm_forward.1} parent=1 // loop_header_branch
      %14 = sbr.rel (%p12) target = $region8
    $region5: #{cm_forward.1} parent=1 // loop_body
      %s16 = ssub.s32 %s11, 1
      %s17 = ssub.s32 %s11, 2
      %s18 = sadd.s32 %s11, 1
      %s19 = ssub.s32 %s11, %s18
      %p20 = scmp.eq.s32.totalorder %s19, 0
      %s22 = sadd.s32 %s21, 1
      %s23 = scalar_select %p20, %s21, %s22
      %p26 = pneg %p20
      %p27 = scmp.eq.s32.totalorder %s11, 1
      %p28 = por %p26, %p27
      %p29 = scmp.ne.s32.totalorder %s21, %s24
      %p30 = scmp.eq.s32.totalorder %s11, 0
      %p31 = por %p29, %p30
      %p32 = scmp.ne.s32.totalorder %s21, %s24
      %p33 = scmp.eq.s32.totalorder %s16, 1
      %p34 = por %p32, %p33
      %p35 = scmp.ne.s32.totalorder %s24, %s25
      %p36 = scmp.eq.s32.totalorder %s16, 0
      %p37 = por %p35, %p36
      %p38 = scmp.ne.s32.totalorder %s24, %s25
      %p39 = scmp.eq.s32.totalorder %s17, 1
      %p40 = por %p38, %p39
      %p42 = scmp.ne.s32.totalorder %s25, %s41
      %p43 = scmp.eq.s32.totalorder %s17, 0
      %p44 = por %p42, %p43
      %s46 = sadd.s32 %s45, 1
      %p49 = scmp.eq.s32.totalorder %s11, 1
      %p50 = scmp.ne.s32.totalorder %s45, %s47
      %p51 = scmp.eq.s32.totalorder %s11, 0
      %p52 = por %p50, %p51
      %p53 = scmp.ne.s32.totalorder %s45, %s47
      %p54 = scmp.eq.s32.totalorder %s16, 1
      %p55 = por %p53, %p54
      %p56 = scmp.ne.s32.totalorder %s47, %s48
      %p57 = scmp.eq.s32.totalorder %s16, 0
      %p58 = por %p56, %p57
      %p59 = scmp.ne.s32.totalorder %s47, %s48
      %p60 = scmp.eq.s32.totalorder %s17, 1
      %p61 = por %p59, %p60
      %p63 = scmp.ne.s32.totalorder %s48, %s62
      %p64 = scmp.eq.s32.totalorder %s17, 0
      %p65 = por %p63, %p64
      %s66 = ssub.s32 %s11, %s18
      %p67 = scmp.eq.s32.totalorder %s66, 0
      %s69 = sadd.s32 %s68, 1
      %s70 = scalar_select %p67, %s68, %s69
      %p73 = pneg %p67
      %p74 = scmp.eq.s32.totalorder %s11, 1
      %p75 = por %p73, %p74
      %p76 = scmp.ne.s32.totalorder %s68, %s71
      %p77 = scmp.eq.s32.totalorder %s11, 0
      %p78 = por %p76, %p77
      %p79 = scmp.ne.s32.totalorder %s68, %s71
      %p80 = scmp.eq.s32.totalorder %s16, 1
      %p81 = por %p79, %p80
      %p82 = scmp.ne.s32.totalorder %s71, %s72
      %p83 = scmp.eq.s32.totalorder %s16, 0
      %p84 = por %p82, %p83
      %p85 = scmp.ne.s32.totalorder %s71, %s72
      %p86 = scmp.eq.s32.totalorder %s17, 1
      %p87 = por %p85, %p86
      %p89 = scmp.ne.s32.totalorder %s72, %s88
      %p90 = scmp.eq.s32.totalorder %s17, 0
      %p91 = por %p89, %p90
      %p92 = scmp.le.s32.totalorder 1, %s11
      %p93 = scmp.lt.s32.totalorder %s11, 3
      %p94 = pnand %p92, %p93
      %p95 = pneg %p94
      // Predicated region
      $region9: #{cm_forward.1} parent=5 // pred_check
        _
      $region10: #{cm_forward.1} parent=5 // pred_check_branch
        %97 = sbr.rel (%p94) target = $region12
      $region11: #{cm_forward.1} parent=5 // pred_region
        %s98 = ssub.s32 %s11, 1
        // Predicated region
        $region13: #{cm_forward.1} parent=11 // pred_check
          %p99 = pneg %p58
        $region14: #{cm_forward.1} parent=11 // pred_check_branch
          %101 = sbr.rel (%p99) target = $region16
        $region15: #{cm_forward.1} parent=11 // pred_region
          _
        $region16: #{cm_forward.1} parent=11 // pred_fallthru
          _
      $region12: #{cm_forward.1} parent=5 // pred_fallthru
        _
      %p102 = scmp.lt.s32.totalorder %s11, 2
      // Predicated region
      $region17: #{cm_forward.1} parent=5 // pred_check
        %p103 = pneg %p102
      $region18: #{cm_forward.1} parent=5 // pred_check_branch
        %105 = sbr.rel (%p103) target = $region20
      $region19: #{cm_forward.1} parent=5 // pred_region
        // Predicated region
        $region21: #{cm_forward.1} parent=19 // pred_check
          %p106 = pneg %p31
        $region22: #{cm_forward.1} parent=19 // pred_check_branch
          %108 = sbr.rel (%p106) target = $region24
        $region23: #{cm_forward.1} parent=19 // pred_region
          %s109 = smul.u32 2, %s11
          %p110 = scmp.lt.s32.totalorder %s109, 3
          %s111 = scalar_select %p110, %s109, 3
          %s112 = smul.addr %s111, 8
          %s113 = scalar_lea.vmem %s0, %s112
          %s114 = smul.u32 2, %s11
        $region24: #{cm_forward.1} parent=19 // pred_fallthru
          _
      $region20: #{cm_forward.1} parent=5 // pred_fallthru
        _
      %p115 = scmp.le.s32.totalorder 1, %s11
      %p116 = scmp.lt.s32.totalorder %s11, 3
      %p117 = pnand %p115, %p116
      %p118 = pneg %p117
      // Predicated region
      $region25: #{cm_forward.1} parent=5 // pred_check
        _
      $region26: #{cm_forward.1} parent=5 // pred_check_branch
        %120 = sbr.rel (%p117) target = $region28
      $region27: #{cm_forward.1} parent=5 // pred_region
        %s121 = ssub.s32 %s11, 1
        %s122 = smul.u32 2, %s16
        %p123 = scmp.lt.s32.totalorder %s122, 3
        %s124 = scalar_select %p123, %s122, 3
        %s125 = smul.addr %s124, 8
        %s126 = scalar_lea.vmem %s0, %s125
        %p127 = pneg %p37
        %p128 = pneg %p34
        %p129 = pneg %p58
        %p130 = pneg %p55
        %p131 = pneg %p84
        %p132 = pneg %p81
        %s133 = sand.u32 %s71, 1
        %s134 = scalar_lea.sflag [#allocation4], %s133
        %s135 = sand.u32 %s71, 1
        %s136 = smul.addr %s135, 16
        %s137 = scalar_lea.vmem [#allocation3], %s136
        %s138 = smul.u32 2, %s16
        %p139 = scmp.lt.s32.totalorder %s138, 3
        %s140 = scalar_select %p139, %s138, 3
        %s141 = smul.addr %s140, 8
        %s142 = scalar_lea.vmem %s0, %s141
        %s143 = smul.u32 2, %s16
        %s144 = smul.u32 2, %s16
        %v145 = vld [vmem:[%s142] sm:$0xff]
        %v146 = vld [vmem:[%s142 + $0x8] sm:$0xff]
        %v147 = vld [vmem:[%s1] sm:$0xff]
        %v148 = vld [vmem:[%s1 + $0x8] sm:$0xff]
        %v149 = vld [vmem:[%s1 + $0x10] sm:$0xff]
        %v150 = vld [vmem:[%s1 + $0x18] sm:$0xff]
        %v151 = vld [vmem:[%s1 + $0x20] sm:$0xff]
        %v152 = vld [vmem:[%s1 + $0x28] sm:$0xff]
        %v153 = vld [vmem:[%s1 + $0x30] sm:$0xff]
        %v154 = vld [vmem:[%s1 + $0x38] sm:$0xff]
        %v155 = vld [vmem:[%s1 + $0x40] sm:$0xff]
        %v156 = vld [vmem:[%s1 + $0x48] sm:$0xff]
        %v157 = vld [vmem:[%s1 + $0x50] sm:$0xff]
        %v158 = vld [vmem:[%s1 + $0x58] sm:$0xff]
        %v159 = vld [vmem:[%s1 + $0x60] sm:$0xff]
        %v160 = vld [vmem:[%s1 + $0x68] sm:$0xff]
        %v161 = vld [vmem:[%s1 + $0x70] sm:$0xff]
        %v162 = vld [vmem:[%s1 + $0x78] sm:$0xff]
        %v163 = vlaneseq
        %v164 = vshrl.u32 %v163, 7
        %v165 = vadd.s32 %v164, 8
        %vm166 = vcmp.lt.s32.totalorder %v164, 0
        %v167 = vsub.s32 0, %v164
        %v168 = vsel %vm166, %v167, %v164
        %v169 = vshrl.u32 %v168, 3
        %v170 = vand.u32 %v168, 7
        %v171 = vsub.s32 0, %v170
        %v172 = vsel %vm166, %v171, %v170
        %vm173 = vcmp.lt.s32.totalorder %v165, 0
        %v174 = vsub.s32 0, %v165
        %v175 = vsel %vm173, %v174, %v165
        %v176 = vshrl.u32 %v175, 3
        %v177 = vand.u32 %v175, 7
        %v178 = vsub.s32 0, %v177
        %v179 = vsel %vm173, %v178, %v177
        %v180 = vrot.slane %v145, 2
        %v181 = vrot.slane %v146, 2
        %vm182 = vcmp.lt.s32.totalorder %v164, 6
        %v183 = vsel %vm182, %v180, %v181
        %v184 = vsel %vm182, %v181, %v180
        %vm185 = vcmp.ge.s32.totalorder %v172, 6
        %vm186 = vcmp.ge.s32.totalorder %v179, 6
        %v187 = vsel %vm185, 1, 0
        %v188 = vsel %vm186, 1, 0
        %vm189 = vcmp.eq.s32.totalorder %v187, 1
        %vm190 = vcmp.eq.s32.totalorder %v188, 1
        %v191 = vsel %vm189, %v184, 0.0
        %v192 = vsel %vm190, %v183, 0.0
        %v193 = vrot.slane %v145, 4
        %v194 = vrot.slane %v146, 4
        %vm195 = vcmp.lt.s32.totalorder %v164, 4
        %v196 = vsel %vm195, %v193, %v194
        %v197 = vsel %vm195, %v194, %v193
        %vm198 = vcmp.ge.s32.totalorder %v172, 4
        %vm199 = vcmp.ge.s32.totalorder %v179, 4
        %v200 = vsel %vm198, 1, 0
        %v201 = vsel %vm199, 1, 0
        %vm202 = vcmp.eq.s32.totalorder %v200, 1
        %vm203 = vcmp.eq.s32.totalorder %v201, 1
        %v204 = vsel %vm202, %v197, 0.0
        %v205 = vsel %vm203, %v196, 0.0
        %v206 = vrot.slane %v145, 5
        %v207 = vrot.slane %v146, 5
        %vm208 = vcmp.lt.s32.totalorder %v164, 3
        %v209 = vsel %vm208, %v206, %v207
        %v210 = vsel %vm208, %v207, %v206
        %vm211 = vcmp.ge.s32.totalorder %v172, 3
        %vm212 = vcmp.ge.s32.totalorder %v179, 3
        %v213 = vsel %vm211, 1, 0
        %v214 = vsel %vm212, 1, 0
        %vm215 = vcmp.eq.s32.totalorder %v213, 1
        %vm216 = vcmp.eq.s32.totalorder %v214, 1
        %v217 = vsel %vm215, %v210, 0.0
        %v218 = vsel %vm216, %v209, 0.0
        %v219 = vrot.slane %v145, 6
        %v220 = vrot.slane %v146, 6
        %vm221 = vcmp.lt.s32.totalorder %v164, 2
        %v222 = vsel %vm221, %v219, %v220
        %v223 = vsel %vm221, %v220, %v219
        %vm224 = vcmp.ge.s32.totalorder %v172, 2
        %vm225 = vcmp.ge.s32.totalorder %v179, 2
        %v226 = vsel %vm224, 1, 0
        %v227 = vsel %vm225, 1, 0
        %vm228 = vcmp.eq.s32.totalorder %v226, 1
        %vm229 = vcmp.eq.s32.totalorder %v227, 1
        %v230 = vsel %vm228, %v223, 0.0
        %v231 = vsel %vm229, %v222, 0.0
        %v232 = vrot.slane %v145, 7
        %v233 = vrot.slane %v146, 7
        %vm234 = vcmp.lt.s32.totalorder %v164, 1
        %v235 = vsel %vm234, %v232, %v233
        %v236 = vsel %vm234, %v233, %v232
        %vm237 = vcmp.ge.s32.totalorder %v172, 1
        %vm238 = vcmp.ge.s32.totalorder %v179, 1
        %v239 = vsel %vm237, 1, 0
        %v240 = vsel %vm238, 1, 0
        %vm241 = vcmp.eq.s32.totalorder %v239, 1
        %vm242 = vcmp.eq.s32.totalorder %v240, 1
        %v243 = vsel %vm241, %v236, 0.0
        %v244 = vsel %vm242, %v235, 0.0
        %v245 = vrot.slane %v145, 1
        %v246 = vrot.slane %v146, 1
        %vm247 = vcmp.lt.s32.totalorder %v164, 7
        %v248 = vsel %vm247, %v245, %v246
        %v249 = vsel %vm247, %v246, %v245
        %vm250 = vcmp.lt.s32.totalorder %v172, 7
        %vm251 = vcmp.lt.s32.totalorder %v179, 7
        %v252 = vsel %vm250, 1, 0
        %v253 = vsel %vm251, 1, 0
        %vm254 = vcmp.eq.s32.totalorder %v252, 1
        %vm255 = vcmp.eq.s32.totalorder %v253, 1
        %v256 = vsel %vm254, %v248, 0.0
        %v257 = vsel %vm255, %v249, 0.0
        %vm258 = vcmp.lt.s32.totalorder %v172, 6
        %vm259 = vcmp.lt.s32.totalorder %v179, 6
        %v260 = vsel %vm258, 1, 0
        %v261 = vsel %vm259, 1, 0
        %vm262 = vcmp.eq.s32.totalorder %v260, 1
        %vm263 = vcmp.eq.s32.totalorder %v261, 1
        %v264 = vsel %vm262, %v183, 0.0
        %v265 = vsel %vm263, %v184, 0.0
        %v266 = vrot.slane %v145, 3
        %v267 = vrot.slane %v146, 3
        %vm268 = vcmp.lt.s32.totalorder %v164, 5
        %v269 = vsel %vm268, %v266, %v267
        %v270 = vsel %vm268, %v267, %v266
        %vm271 = vcmp.lt.s32.totalorder %v172, 5
        %vm272 = vcmp.lt.s32.totalorder %v179, 5
        %v273 = vsel %vm271, 1, 0
        %v274 = vsel %vm272, 1, 0
        %vm275 = vcmp.eq.s32.totalorder %v273, 1
        %vm276 = vcmp.eq.s32.totalorder %v274, 1
        %v277 = vsel %vm275, %v269, 0.0
        %v278 = vsel %vm276, %v270, 0.0
        %vm279 = vcmp.lt.s32.totalorder %v172, 4
        %vm280 = vcmp.lt.s32.totalorder %v179, 4
        %v281 = vsel %vm279, 1, 0
        %v282 = vsel %vm280, 1, 0
        %vm283 = vcmp.eq.s32.totalorder %v281, 1
        %vm284 = vcmp.eq.s32.totalorder %v282, 1
        %v285 = vsel %vm283, %v196, 0.0
        %v286 = vsel %vm284, %v197, 0.0
        %vm287 = vcmp.lt.s32.totalorder %v172, 2
        %vm288 = vcmp.lt.s32.totalorder %v179, 2
        %v289 = vsel %vm287, 1, 0
        %v290 = vsel %vm288, 1, 0
        %vm291 = vcmp.eq.s32.totalorder %v289, 1
        %vm292 = vcmp.eq.s32.totalorder %v290, 1
        %v293 = vsel %vm291, %v222, 0.0
        %v294 = vsel %vm292, %v223, 0.0
        %v295 = vmax.f32 %v145, 0.0
        %v296 = vmax.f32 %v146, 0.0
        %297 = vst [vmem:[#allocation2] sm:$0xff] %v295
        %298 = vst [vmem:[#allocation2 + $0x38] sm:$0xff] %v296
        %v299 = vadd.f32 %v243, %v145
        %v300 = vadd.f32 %v244, %v146
        %v301 = vadd.f32 %v299, %v256
        %v302 = vadd.f32 %v300, %v257
        %v303 = vmax.f32 %v301, 0.0
        %v304 = vmax.f32 %v302, 0.0
        %305 = vst [vmem:[#allocation2 + $0x8] sm:$0xff] %v303
        %306 = vst [vmem:[#allocation2 + $0x40] sm:$0xff] %v304
        %v307 = vadd.f32 %v230, %v145
        %v308 = vadd.f32 %v231, %v146
        %v309 = vadd.f32 %v307, %v264
        %v310 = vadd.f32 %v308, %v265
        %v311 = vmax.f32 %v309, 0.0
        %v312 = vmax.f32 %v310, 0.0
        %313 = vst [vmem:[#allocation2 + $0x10] sm:$0xff] %v311
        %314 = vst [vmem:[#allocation2 + $0x48] sm:$0xff] %v312
        %v315 = vadd.f32 %v217, %v145
        %v316 = vadd.f32 %v218, %v146
        %v317 = vadd.f32 %v315, %v277
        %v318 = vadd.f32 %v316, %v278
        %v319 = vmax.f32 %v317, 0.0
        %v320 = vmax.f32 %v318, 0.0
        %321 = vst [vmem:[#allocation2 + $0x18] sm:$0xff] %v319
        %322 = vst [vmem:[#allocation2 + $0x50] sm:$0xff] %v320
        %v323 = vadd.f32 %v230, %v243
        %v324 = vadd.f32 %v231, %v244
        %v325 = vadd.f32 %v323, %v145
        %v326 = vadd.f32 %v324, %v146
        %v327 = vadd.f32 %v325, %v256
        %v328 = vadd.f32 %v326, %v257
        %v329 = vadd.f32 %v327, %v264
        %v330 = vadd.f32 %v328, %v265
        %v331 = vmax.f32 %v329, 0.0
        %v332 = vmax.f32 %v330, 0.0
        %333 = vst [vmem:[#allocation2 + $0x20] sm:$0xff] %v331
        %334 = vst [vmem:[#allocation2 + $0x58] sm:$0xff] %v332
        %v335 = vadd.f32 %v204, %v230
        %v336 = vadd.f32 %v205, %v231
        %v337 = vadd.f32 %v335, %v145
        %v338 = vadd.f32 %v336, %v146
        %v339 = vadd.f32 %v337, %v264
        %v340 = vadd.f32 %v338, %v265
        %v341 = vadd.f32 %v339, %v285
        %v342 = vadd.f32 %v340, %v286
        %v343 = vmax.f32 %v341, 0.0
        %v344 = vmax.f32 %v342, 0.0
        %345 = vst [vmem:[#allocation2 + $0x28] sm:$0xff] %v343
        %346 = vst [vmem:[#allocation2 + $0x60] sm:$0xff] %v344
        %v347 = vadd.f32 %v191, %v217
        %v348 = vadd.f32 %v192, %v218
        %v349 = vadd.f32 %v347, %v145
        %v350 = vadd.f32 %v348, %v146
        %v351 = vadd.f32 %v349, %v277
        %v352 = vadd.f32 %v350, %v278
        %v353 = vadd.f32 %v351, %v293
        %v354 = vadd.f32 %v352, %v294
        %v355 = vmax.f32 %v353, 0.0
        %v356 = vmax.f32 %v354, 0.0
        %357 = vst [vmem:[#allocation2 + $0x30] sm:$0xff] %v355
        %358 = vst [vmem:[#allocation2 + $0x68] sm:$0xff] %v356
        %v359 = vld [vmem:[#allocation2] ss:$7 sm:$0xff]
        %s360 = scalar_lea.vmem [#allocation2], 56
        %v361 = vld [vmem:[%s360] ss:$7 sm:$0xff]
        %362 = vmatpush.msra.mxu0 %v162
        %363 = vmatpush.msra.mxu0 %v161
        %364 = vmatpush.msra.mxu0 %v160
        %365 = vmatpush.msra.mxu0 %v159
        %366 = vmatpush.msra.mxu0 %v158
        %367 = vmatpush.msra.mxu0 %v157
        %368 = vmatpush.msra.mxu0 %v156
        %369 = vmatpush.msra.mxu0 %v155
        %370 = vmatpush.msra.mxu0 %v154
        %371 = vmatpush.msra.mxu0 %v153
        %372 = vmatpush.msra.mxu0 %v152
        %373 = vmatpush.msra.mxu0 %v151
        %374 = vmatpush.msra.mxu0 %v150
        %375 = vmatpush.msra.mxu0 %v149
        %376 = vmatpush.msra.mxu0 %v148
        %377 = vmatpush.msra.mxu0 %v147
        %378 = vmatmul.f32.gmra.mxu0 %v359
        %v379 = vpop.f32.mrf.mxu0
        %v380 = vadd.f32 0.0, %v379
        %381 = vmatmul.f32.gmra.mxu0 %v361
        %v382 = vpop.f32.mrf.mxu0
        %v383 = vadd.f32 0.0, %v382
        %384 = vdwg.mxu0
        %s385 = scalar_lea.vmem [#allocation2], 1
        %v386 = vld [vmem:[%s385] ss:$7 sm:$0xff]
        %s387 = scalar_lea.vmem [#allocation2], 57
        %v388 = vld [vmem:[%s387] ss:$7 sm:$0xff]
        %389 = vmatpush.msra.mxu0 %v162
        %390 = vmatpush.msra.mxu0 %v161
        %391 = vmatpush.msra.mxu0 %v160
        %392 = vmatpush.msra.mxu0 %v159
        %393 = vmatpush.msra.mxu0 %v158
        %394 = vmatpush.msra.mxu0 %v157
        %395 = vmatpush.msra.mxu0 %v156
        %396 = vmatpush.msra.mxu0 %v155
        %397 = vmatpush.msra.mxu0 %v154
        %398 = vmatpush.msra.mxu0 %v153
        %399 = vmatpush.msra.mxu0 %v152
        %400 = vmatpush.msra.mxu0 %v151
        %401 = vmatpush.msra.mxu0 %v150
        %402 = vmatpush.msra.mxu0 %v149
        %403 = vmatpush.msra.mxu0 %v148
        %404 = vmatpush.msra.mxu0 %v147
        %405 = vmatmul.f32.gmra.mxu0 %v386
        %v406 = vpop.f32.mrf.mxu0
        %v407 = vadd.f32 0.0, %v406
        %408 = vmatmul.f32.gmra.mxu0 %v388
        %v409 = vpop.f32.mrf.mxu0
        %v410 = vadd.f32 0.0, %v409
        %411 = vdwg.mxu0
        %v412 = vmax.f32 %v380, %v407
        %v413 = vmax.f32 %v383, %v410
        %v414 = vsub.f32 %v380, %v412
        %v415 = vsub.f32 %v383, %v413
        %v416 = vmul.f32 %v414, 1.442695
        %v417 = vpow.pop %v416
        %v418 = vmul.f32 %v415, 1.442695
        %v419 = vpow.pop %v418
        %v420 = vsub.f32 %v407, %v412
        %v421 = vsub.f32 %v410, %v413
        %v422 = vmul.f32 %v420, 1.442695
        %v423 = vpow.pop %v422
        %v424 = vmul.f32 %v421, 1.442695
        %v425 = vpow.pop %v424
        %427 = vset.pattern.permute.xlu0 0
        %428 = vperm.xlu0 %427, %v417
        %v429 = vpop.permute.xlu0 %428
        %432 = vset.pattern.permute.xlu0 0
        %433 = vperm.xlu0 %432, %v419
        %v434 = vpop.permute.xlu0 %433
        %v436 = vmul.f32 %v429, %v359
        %v437 = vmul.f32 %v434, %v361
        %439 = vset.pattern.permute.xlu0 0
        %440 = vperm.xlu0 %439, %v423
        %v441 = vpop.permute.xlu0 %440
        %444 = vset.pattern.permute.xlu0 0
        %445 = vperm.xlu0 %444, %v425
        %v446 = vpop.permute.xlu0 %445
        %v448 = vmul.f32 %v441, %v386
        %v449 = vmul.f32 %v446, %v388
        %v450 = vadd.f32 %v436, %v448
        %v451 = vadd.f32 %v437, %v449
        %v452 = vadd.f32 %v417, %v423
        %v453 = vadd.f32 %v419, %v425
        %s454 = scalar_lea.vmem [#allocation2], 2
        %v455 = vld [vmem:[%s454] ss:$7 sm:$0xff]
        %s456 = scalar_lea.vmem [#allocation2], 58
        %v457 = vld [vmem:[%s456] ss:$7 sm:$0xff]
        %458 = vmatpush.msra.mxu0 %v162
        %459 = vmatpush.msra.mxu0 %v161
        %460 = vmatpush.msra.mxu0 %v160
        %461 = vmatpush.msra.mxu0 %v159
        %462 = vmatpush.msra.mxu0 %v158
        %463 = vmatpush.msra.mxu0 %v157
        %464 = vmatpush.msra.mxu0 %v156
        %465 = vmatpush.msra.mxu0 %v155
        %466 = vmatpush.msra.mxu0 %v154
        %467 = vmatpush.msra.mxu0 %v153
        %468 = vmatpush.msra.mxu0 %v152
        %469 = vmatpush.msra.mxu0 %v151
        %470 = vmatpush.msra.mxu0 %v150
        %471 = vmatpush.msra.mxu0 %v149
        %472 = vmatpush.msra.mxu0 %v148
        %473 = vmatpush.msra.mxu0 %v147
        %474 = vmatmul.f32.gmra.mxu0 %v455
        %v475 = vpop.f32.mrf.mxu0
        %v476 = vadd.f32 0.0, %v475
        %477 = vmatmul.f32.gmra.mxu0 %v457
        %v478 = vpop.f32.mrf.mxu0
        %v479 = vadd.f32 0.0, %v478
        %480 = vdwg.mxu0
        %v481 = vmax.f32 %v412, %v476
        %v482 = vmax.f32 %v413, %v479
        %v483 = vsub.f32 %v412, %v481
        %v484 = vsub.f32 %v413, %v482
        %v485 = vmul.f32 %v483, 1.442695
        %v486 = vpow.pop %v485
        %v487 = vmul.f32 %v484, 1.442695
        %v488 = vpow.pop %v487
        %v489 = vsub.f32 %v476, %v481
        %v490 = vsub.f32 %v479, %v482
        %v491 = vmul.f32 %v489, 1.442695
        %v492 = vpow.pop %v491
        %v493 = vmul.f32 %v490, 1.442695
        %v494 = vpow.pop %v493
        %496 = vset.pattern.permute.xlu0 0
        %497 = vperm.xlu0 %496, %v486
        %v498 = vpop.permute.xlu0 %497
        %501 = vset.pattern.permute.xlu0 0
        %502 = vperm.xlu0 %501, %v488
        %v503 = vpop.permute.xlu0 %502
        %v505 = vmul.f32 %v498, %v450
        %v506 = vmul.f32 %v503, %v451
        %508 = vset.pattern.permute.xlu0 0
        %509 = vperm.xlu0 %508, %v492
        %v510 = vpop.permute.xlu0 %509
        %513 = vset.pattern.permute.xlu0 0
        %514 = vperm.xlu0 %513, %v494
        %v515 = vpop.permute.xlu0 %514
        %v517 = vmul.f32 %v510, %v455
        %v518 = vmul.f32 %v515, %v457
        %v519 = vadd.f32 %v505, %v517
        %v520 = vadd.f32 %v506, %v518
        %v521 = vmul.f32 %v486, %v452
        %v522 = vmul.f32 %v488, %v453
        %v523 = vadd.f32 %v521, %v492
        %v524 = vadd.f32 %v522, %v494
        %s525 = scalar_lea.vmem [#allocation2], 3
        %v526 = vld [vmem:[%s525] ss:$7 sm:$0xff]
        %s527 = scalar_lea.vmem [#allocation2], 59
        %v528 = vld [vmem:[%s527] ss:$7 sm:$0xff]
        %529 = vmatpush.msra.mxu0 %v162
        %530 = vmatpush.msra.mxu0 %v161
        %531 = vmatpush.msra.mxu0 %v160
        %532 = vmatpush.msra.mxu0 %v159
        %533 = vmatpush.msra.mxu0 %v158
        %534 = vmatpush.msra.mxu0 %v157
        %535 = vmatpush.msra.mxu0 %v156
        %536 = vmatpush.msra.mxu0 %v155
        %537 = vmatpush.msra.mxu0 %v154
        %538 = vmatpush.msra.mxu0 %v153
        %539 = vmatpush.msra.mxu0 %v152
        %540 = vmatpush.msra.mxu0 %v151
        %541 = vmatpush.msra.mxu0 %v150
        %542 = vmatpush.msra.mxu0 %v149
        %543 = vmatpush.msra.mxu0 %v148
        %544 = vmatpush.msra.mxu0 %v147
        %545 = vmatmul.f32.gmra.mxu0 %v526
        %v546 = vpop.f32.mrf.mxu0
        %v547 = vadd.f32 0.0, %v546
        %548 = vmatmul.f32.gmra.mxu0 %v528
        %v549 = vpop.f32.mrf.mxu0
        %v550 = vadd.f32 0.0, %v549
        %551 = vdwg.mxu0
        %v552 = vmax.f32 %v481, %v547
        %v553 = vmax.f32 %v482, %v550
        %v554 = vsub.f32 %v481, %v552
        %v555 = vsub.f32 %v482, %v553
        %v556 = vmul.f32 %v554, 1.442695
        %v557 = vpow.pop %v556
        %v558 = vmul.f32 %v555, 1.442695
        %v559 = vpow.pop %v558
        %v560 = vsub.f32 %v547, %v552
        %v561 = vsub.f32 %v550, %v553
        %v562 = vmul.f32 %v560, 1.442695
        %v563 = vpow.pop %v562
        %v564 = vmul.f32 %v561, 1.442695
        %v565 = vpow.pop %v564
        %567 = vset.pattern.permute.xlu0 0
        %568 = vperm.xlu0 %567, %v557
        %v569 = vpop.permute.xlu0 %568
        %572 = vset.pattern.permute.xlu0 0
        %573 = vperm.xlu0 %572, %v559
        %v574 = vpop.permute.xlu0 %573
        %v576 = vmul.f32 %v569, %v519
        %v577 = vmul.f32 %v574, %v520
        %579 = vset.pattern.permute.xlu0 0
        %580 = vperm.xlu0 %579, %v563
        %v581 = vpop.permute.xlu0 %580
        %584 = vset.pattern.permute.xlu0 0
        %585 = vperm.xlu0 %584, %v565
        %v586 = vpop.permute.xlu0 %585
        %v588 = vmul.f32 %v581, %v526
        %v589 = vmul.f32 %v586, %v528
        %v590 = vadd.f32 %v576, %v588
        %v591 = vadd.f32 %v577, %v589
        %v592 = vmul.f32 %v557, %v523
        %v593 = vmul.f32 %v559, %v524
        %v594 = vadd.f32 %v592, %v563
        %v595 = vadd.f32 %v593, %v565
        %s596 = scalar_lea.vmem [#allocation2], 4
        %v597 = vld [vmem:[%s596] ss:$7 sm:$0xff]
        %s598 = scalar_lea.vmem [#allocation2], 60
        %v599 = vld [vmem:[%s598] ss:$7 sm:$0xff]
        %600 = vmatpush.msra.mxu0 %v162
        %601 = vmatpush.msra.mxu0 %v161
        %602 = vmatpush.msra.mxu0 %v160
        %603 = vmatpush.msra.mxu0 %v159
        %604 = vmatpush.msra.mxu0 %v158
        %605 = vmatpush.msra.mxu0 %v157
        %606 = vmatpush.msra.mxu0 %v156
        %607 = vmatpush.msra.mxu0 %v155
        %608 = vmatpush.msra.mxu0 %v154
        %609 = vmatpush.msra.mxu0 %v153
        %610 = vmatpush.msra.mxu0 %v152
        %611 = vmatpush.msra.mxu0 %v151
        %612 = vmatpush.msra.mxu0 %v150
        %613 = vmatpush.msra.mxu0 %v149
        %614 = vmatpush.msra.mxu0 %v148
        %615 = vmatpush.msra.mxu0 %v147
        %616 = vmatmul.f32.gmra.mxu0 %v597
        %v617 = vpop.f32.mrf.mxu0
        %v618 = vadd.f32 0.0, %v617
        %619 = vmatmul.f32.gmra.mxu0 %v599
        %v620 = vpop.f32.mrf.mxu0
        %v621 = vadd.f32 0.0, %v620
        %622 = vdwg.mxu0
        %v623 = vmax.f32 %v552, %v618
        %v624 = vmax.f32 %v553, %v621
        %v625 = vsub.f32 %v552, %v623
        %v626 = vsub.f32 %v553, %v624
        %v627 = vmul.f32 %v625, 1.442695
        %v628 = vpow.pop %v627
        %v629 = vmul.f32 %v626, 1.442695
        %v630 = vpow.pop %v629
        %v631 = vsub.f32 %v618, %v623
        %v632 = vsub.f32 %v621, %v624
        %v633 = vmul.f32 %v631, 1.442695
        %v634 = vpow.pop %v633
        %v635 = vmul.f32 %v632, 1.442695
        %v636 = vpow.pop %v635
        %638 = vset.pattern.permute.xlu0 0
        %639 = vperm.xlu0 %638, %v628
        %v640 = vpop.permute.xlu0 %639
        %643 = vset.pattern.permute.xlu0 0
        %644 = vperm.xlu0 %643, %v630
        %v645 = vpop.permute.xlu0 %644
        %v647 = vmul.f32 %v640, %v590
        %v648 = vmul.f32 %v645, %v591
        %650 = vset.pattern.permute.xlu0 0
        %651 = vperm.xlu0 %650, %v634
        %v652 = vpop.permute.xlu0 %651
        %655 = vset.pattern.permute.xlu0 0
        %656 = vperm.xlu0 %655, %v636
        %v657 = vpop.permute.xlu0 %656
        %v659 = vmul.f32 %v652, %v597
        %v660 = vmul.f32 %v657, %v599
        %v661 = vadd.f32 %v647, %v659
        %v662 = vadd.f32 %v648, %v660
        %v663 = vmul.f32 %v628, %v594
        %v664 = vmul.f32 %v630, %v595
        %v665 = vadd.f32 %v663, %v634
        %v666 = vadd.f32 %v664, %v636
        %s667 = scalar_lea.vmem [#allocation2], 5
        %v668 = vld [vmem:[%s667] ss:$7 sm:$0xff]
        %s669 = scalar_lea.vmem [#allocation2], 61
        %v670 = vld [vmem:[%s669] ss:$7 sm:$0xff]
        %671 = vmatpush.msra.mxu0 %v162
        %672 = vmatpush.msra.mxu0 %v161
        %673 = vmatpush.msra.mxu0 %v160
        %674 = vmatpush.msra.mxu0 %v159
        %675 = vmatpush.msra.mxu0 %v158
        %676 = vmatpush.msra.mxu0 %v157
        %677 = vmatpush.msra.mxu0 %v156
        %678 = vmatpush.msra.mxu0 %v155
        %679 = vmatpush.msra.mxu0 %v154
        %680 = vmatpush.msra.mxu0 %v153
        %681 = vmatpush.msra.mxu0 %v152
        %682 = vmatpush.msra.mxu0 %v151
        %683 = vmatpush.msra.mxu0 %v150
        %684 = vmatpush.msra.mxu0 %v149
        %685 = vmatpush.msra.mxu0 %v148
        %686 = vmatpush.msra.mxu0 %v147
        %687 = vmatmul.f32.gmra.mxu0 %v668
        %v688 = vpop.f32.mrf.mxu0
        %v689 = vadd.f32 0.0, %v688
        %690 = vmatmul.f32.gmra.mxu0 %v670
        %v691 = vpop.f32.mrf.mxu0
        %v692 = vadd.f32 0.0, %v691
        %693 = vdwg.mxu0
        %v694 = vmax.f32 %v623, %v689
        %v695 = vmax.f32 %v624, %v692
        %v696 = vsub.f32 %v623, %v694
        %v697 = vsub.f32 %v624, %v695
        %v698 = vmul.f32 %v696, 1.442695
        %v699 = vpow.pop %v698
        %v700 = vmul.f32 %v697, 1.442695
        %v701 = vpow.pop %v700
        %v702 = vsub.f32 %v689, %v694
        %v703 = vsub.f32 %v692, %v695
        %v704 = vmul.f32 %v702, 1.442695
        %v705 = vpow.pop %v704
        %v706 = vmul.f32 %v703, 1.442695
        %v707 = vpow.pop %v706
        %709 = vset.pattern.permute.xlu0 0
        %710 = vperm.xlu0 %709, %v699
        %v711 = vpop.permute.xlu0 %710
        %714 = vset.pattern.permute.xlu0 0
        %715 = vperm.xlu0 %714, %v701
        %v716 = vpop.permute.xlu0 %715
        %v718 = vmul.f32 %v711, %v661
        %v719 = vmul.f32 %v716, %v662
        %721 = vset.pattern.permute.xlu0 0
        %722 = vperm.xlu0 %721, %v705
        %v723 = vpop.permute.xlu0 %722
        %726 = vset.pattern.permute.xlu0 0
        %727 = vperm.xlu0 %726, %v707
        %v728 = vpop.permute.xlu0 %727
        %v730 = vmul.f32 %v723, %v668
        %v731 = vmul.f32 %v728, %v670
        %v732 = vadd.f32 %v718, %v730
        %v733 = vadd.f32 %v719, %v731
        %v734 = vmul.f32 %v699, %v665
        %v735 = vmul.f32 %v701, %v666
        %v736 = vadd.f32 %v734, %v705
        %v737 = vadd.f32 %v735, %v707
        %s738 = scalar_lea.vmem [#allocation2], 6
        %v739 = vld [vmem:[%s738] ss:$7 sm:$0xff]
        %s740 = scalar_lea.vmem [#allocation2], 62
        %v741 = vld [vmem:[%s740] ss:$7 sm:$0xff]
        %742 = vmatpush.msra.mxu0 %v162
        %743 = vmatpush.msra.mxu0 %v161
        %744 = vmatpush.msra.mxu0 %v160
        %745 = vmatpush.msra.mxu0 %v159
        %746 = vmatpush.msra.mxu0 %v158
        %747 = vmatpush.msra.mxu0 %v157
        %748 = vmatpush.msra.mxu0 %v156
        %749 = vmatpush.msra.mxu0 %v155
        %750 = vmatpush.msra.mxu0 %v154
        %751 = vmatpush.msra.mxu0 %v153
        %752 = vmatpush.msra.mxu0 %v152
        %753 = vmatpush.msra.mxu0 %v151
        %754 = vmatpush.msra.mxu0 %v150
        %755 = vmatpush.msra.mxu0 %v149
        %756 = vmatpush.msra.mxu0 %v148
        %757 = vmatpush.msra.mxu0 %v147
        %758 = vmatmul.f32.gmra.mxu0 %v739
        %v759 = vpop.f32.mrf.mxu0
        %v760 = vadd.f32 0.0, %v759
        %761 = vmatmul.f32.gmra.mxu0 %v741
        %v762 = vpop.f32.mrf.mxu0
        %v763 = vadd.f32 0.0, %v762
        %764 = vdwg.mxu0
        %v765 = vmax.f32 %v694, %v760
        %v766 = vmax.f32 %v695, %v763
        %v767 = vsub.f32 %v694, %v765
        %v768 = vsub.f32 %v695, %v766
        %v769 = vmul.f32 %v767, 1.442695
        %v770 = vpow.pop %v769
        %v771 = vmul.f32 %v768, 1.442695
        %v772 = vpow.pop %v771
        %v773 = vsub.f32 %v760, %v765
        %v774 = vsub.f32 %v763, %v766
        %v775 = vmul.f32 %v773, 1.442695
        %v776 = vpow.pop %v775
        %v777 = vmul.f32 %v774, 1.442695
        %v778 = vpow.pop %v777
        %780 = vset.pattern.permute.xlu0 0
        %781 = vperm.xlu0 %780, %v770
        %v782 = vpop.permute.xlu0 %781
        %785 = vset.pattern.permute.xlu0 0
        %786 = vperm.xlu0 %785, %v772
        %v787 = vpop.permute.xlu0 %786
        %v789 = vmul.f32 %v782, %v732
        %v790 = vmul.f32 %v787, %v733
        %792 = vset.pattern.permute.xlu0 0
        %793 = vperm.xlu0 %792, %v776
        %v794 = vpop.permute.xlu0 %793
        %797 = vset.pattern.permute.xlu0 0
        %798 = vperm.xlu0 %797, %v778
        %v799 = vpop.permute.xlu0 %798
        %v801 = vmul.f32 %v794, %v739
        %v802 = vmul.f32 %v799, %v741
        %v803 = vadd.f32 %v789, %v801
        %v804 = vadd.f32 %v790, %v802
        %v805 = vmul.f32 %v770, %v736
        %v806 = vmul.f32 %v772, %v737
        %v807 = vadd.f32 %v805, %v776
        %v808 = vadd.f32 %v806, %v778
        %v809 = vrcp.pop %v807
        %v810 = vrcp.pop %v808
        %812 = vset.pattern.permute.xlu0 0
        %813 = vperm.xlu0 %812, %v809
        %v814 = vpop.permute.xlu0 %813
        %817 = vset.pattern.permute.xlu0 0
        %818 = vperm.xlu0 %817, %v810
        %v819 = vpop.permute.xlu0 %818
        %v821 = vmul.f32 %v803, %v814
        %v822 = vmul.f32 %v804, %v819
        %823 = vst [vmem:[%s137] sm:$0xff] %v821
        %824 = vst [vmem:[%s137 + $0x8] sm:$0xff] %v822
        %s825 = sand.u32 %s71, 1
        %s826 = scalar_lea.sflag [#allocation4], %s825
        %s827 = sand.u32 %s71, 1
        %s828 = smul.addr %s827, 16
        %s829 = scalar_lea.vmem [#allocation3], %s828
        // Predicated region
        $region29: #{cm_forward.1} parent=27 // pred_check
          %p830 = pneg %p81
        $region30: #{cm_forward.1} parent=27 // pred_check_branch
          %832 = sbr.rel (%p830) target = $region32
        $region31: #{cm_forward.1} parent=27 // pred_region
          %s833 = smul.u32 2, %s16
          %835 = vsyncadd %s826, 0
          %s836 = smul.addr %s833, 8
          %s837 = scalar_lea.hbm %s2, %s836
          %s838 = sshll.u32 %s829, 4
          %s839 = int_to_ptr.vmem [resolvable:$true] %s838
          %s840 = sshll.u32 %s837, 4
          %s841 = int_to_ptr.hbm [resolvable:$true] %s840
          %846 = dma.vmem_to_hbm [thread:$0]  %s839, 256, %s841, %s826, 128, 128, 8
        $region32: #{cm_forward.1} parent=27 // pred_fallthru
          _
      $region28: #{cm_forward.1} parent=5 // pred_fallthru
        _
      %p847 = scmp.le.s32.totalorder 2, %s11
      // Predicated region
      $region33: #{cm_forward.1} parent=5 // pred_check
        %p848 = pneg %p847
      $region34: #{cm_forward.1} parent=5 // pred_check_branch
        %850 = sbr.rel (%p848) target = $region36
      $region35: #{cm_forward.1} parent=5 // pred_region
        %s851 = ssub.s32 %s11, 2
        // Predicated region
        $region37: #{cm_forward.1} parent=35 // pred_check
          %p852 = pneg %p87
        $region38: #{cm_forward.1} parent=35 // pred_check_branch
          %854 = sbr.rel (%p852) target = $region40
        $region39: #{cm_forward.1} parent=35 // pred_region
          %s855 = sand.u32 %s72, 1
          %s856 = scalar_lea.sflag [#allocation4], %s855
          %s857 = sand.u32 %s72, 1
          %s858 = smul.addr %s857, 16
          %s859 = scalar_lea.vmem [#allocation3], %s858
          %861 = dma.done %s856, 256
        $region40: #{cm_forward.1} parent=35 // pred_fallthru
          _
      $region36: #{cm_forward.1} parent=5 // pred_fallthru
        _
    $region6: #{cm_forward.1} parent=1 // loop_footer
      %s15 = sadd.s32 1, %s11
    $region7: #{cm_forward.1} parent=1 // loop_footer_branch
      %10 = sbr.rel target = $region3
    $region8: #{cm_forward.1} parent=1 // loop_exit
      _
    %862 = vsyncpa [#allocation4], 1
    %s863 = scalar_lea.sflag [#allocation4], 1
    %864 = vsyncpa %s863, 1

</llo_original>
